<compile_context>
chip_gen: v7x
topology: tpu7x:2x2x1
jax: 0.10.0
libtpu: 0.0.40
codegen_flags: <defaults>
</compile_context>

<pallas_src>
import jax
import jax.numpy as jnp
from jax.experimental import pallas as pl
from jax.experimental.pallas import tpu as pltpu


def _u_dot_v_kernel(hu_ref, hv_ref, o_ref):
    # hu_ref, hv_ref: (TILE_E, D) gathered endpoint features for this edge tile.
    # o_ref:          (1, TILE_E) lane-dense per-edge dot-product scores.
    prod = hu_ref[...].astype(jnp.float32) * hv_ref[...].astype(jnp.float32)
    scores = jnp.sum(prod, axis=-1)                 # (TILE_E,), f32 accumulation
    o_ref[...] = scores[None, :].astype(o_ref.dtype)


def dot_product_predictor(src, dst, h, *, tile_e=512):
    """Pallas implementation of DotProductPredictor.forward.

    src, dst: int32 [E] edge endpoint indices.
    h:        float [N, D] node features.
    returns:  [E, 1] edge scores (dtype of h, accumulated in float32).
    """
    E = int(src.shape[0])
    N, D = h.shape
    itemsize = jnp.dtype(h.dtype).itemsize

    # Pick the edge tile: large enough to amortize the ~0.35us per-grid-step
    # pipeline overhead, small enough that 2 inputs x 2 pipeline buffers stay
    # well inside VMEM (v7x has only 64 MiB physical -> ~16 MiB input budget).
    input_budget = 16 * 1024 * 1024
    bytes_per_edge_row = 2 * 2 * D * itemsize          # 2 inputs x 2 buffers
    max_rows = max(8, (input_budget // bytes_per_edge_row) // 8 * 8)
    tile = int(min(tile_e, max_rows, ((E + 7) // 8) * 8))
    tile = max(8, (tile // 8) * 8)                     # keep a multiple of 8

    e_pad = int(pl.cdiv(E, tile)) * tile
    grid = (e_pad // tile,)

    # Pad only the index vectors (O(E) ints) — never the [E, D] feature arrays.
    if e_pad != E:
        pad = e_pad - E
        src = jnp.pad(src, (0, pad))                   # node 0: valid gather,
        dst = jnp.pad(dst, (0, pad))                   # padded scores sliced off

    # Endpoint gather (plain-JAX glue).
    # TODO(synk): move this gather into the kernel (scalar-prefetched src/dst
    # indices + per-row DMA gather from HBM-resident h) to avoid materializing
    # two [E, D] intermediates in HBM.
    h_u = jnp.take(h, src, axis=0)                     # (E_pad, D)
    h_v = jnp.take(h, dst, axis=0)                     # (E_pad, D)

    # TODO(synk): when D < 128, pack 128 // D edges per vreg row (segmented
    # lane reduction) to recover lane utilization.

    input_vmem = bytes_per_edge_row * tile
    vmem_limit = int(max(2 * input_vmem, 16 * 1024 * 1024))

    out = pl.pallas_call(
        _u_dot_v_kernel,
        out_shape=jax.ShapeDtypeStruct((1, e_pad), h.dtype),
        grid_spec=pltpu.PrefetchScalarGridSpec(
            num_scalar_prefetch=0,
            grid=grid,
            in_specs=[
                pl.BlockSpec((tile, D), lambda i: (i, 0)),
                pl.BlockSpec((tile, D), lambda i: (i, 0)),
            ],
            out_specs=pl.BlockSpec((1, tile), lambda i: (0, i)),
        ),
        compiler_params=pltpu.CompilerParams(
            dimension_semantics=("parallel",),
            vmem_limit_bytes=vmem_limit,
        ),
    )(h_u, h_v)

    return out[0, :E].reshape(E, 1)


if __name__ == "__main__":
    key = jax.random.PRNGKey(0)
    k_h, k_src, k_dst = jax.random.split(key, 3)

    # Small case (matches the module's tiny-graph usage).
    N, D, E = 8, 32, 16
    h = jax.random.normal(k_h, (N, D), dtype=jnp.float32)
    src = jax.random.randint(k_src, (E,), 0, N, dtype=jnp.int32)
    dst = jax.random.randint(k_dst, (E,), 0, N, dtype=jnp.int32)

    score = jax.block_until_ready(dot_product_predictor(src, dst, h))
    ref = jnp.sum(h[src] * h[dst], axis=-1, keepdims=True)
    assert score.shape == (E, 1), score.shape
    assert jnp.allclose(score, ref, atol=1e-5, rtol=1e-5)

    # Larger case: exercises the multi-tile grid, 512-wide lane-dense output
    # blocks, and the ragged tail (E not a multiple of the tile).
    N2, D2, E2 = 64, 32, 1000
    k_h2, k_s2, k_d2 = jax.random.split(jax.random.PRNGKey(1), 3)
    h2 = jax.random.normal(k_h2, (N2, D2), dtype=jnp.float32)
    src2 = jax.random.randint(k_s2, (E2,), 0, N2, dtype=jnp.int32)
    dst2 = jax.random.randint(k_d2, (E2,), 0, N2, dtype=jnp.int32)

    score2 = jax.block_until_ready(dot_product_predictor(src2, dst2, h2))
    ref2 = jnp.sum(h2[src2] * h2[dst2], axis=-1, keepdims=True)
    assert score2.shape == (E2, 1), score2.shape
    assert jnp.allclose(score2, ref2, atol=1e-4, rtol=1e-4)

    print("KERNEL_OK")
</pallas_src>

<mosaic_0001>
module attributes {stable_mosaic.version = 11 : i64} {
  func.func @_u_dot_v_kernel(%arg0: i32, %arg1: memref<16x32xf32, #tpu.memory_space<vmem>>, %arg2: memref<16x32xf32, #tpu.memory_space<vmem>>, %arg3: memref<1x16xf32, #tpu.memory_space<vmem>>) attributes {dimension_semantics = [#tpu.dimension_semantics<parallel>], iteration_bounds = array<i64: 1>, scalar_prefetch = 0 : i64, scratch_operands = 0 : i64, tpu.core_type = #tpu.core_type<tc>, window_params = [{transform_indices = @transform_0, window_bounds = array<i64: 16, 32>}, {transform_indices = @transform_1, window_bounds = array<i64: 16, 32>}, {transform_indices = @transform_2, window_bounds = array<i64: 1, 16>}]} {
    %c0 = arith.constant 0 : index
    %c0_0 = arith.constant 0 : index
    %0 = vector.load %arg1[%c0, %c0_0] : memref<16x32xf32, #tpu.memory_space<vmem>>, vector<16x32xf32>
    %c0_1 = arith.constant 0 : index
    %c0_2 = arith.constant 0 : index
    %1 = vector.load %arg2[%c0_1, %c0_2] : memref<16x32xf32, #tpu.memory_space<vmem>>, vector<16x32xf32>
    %2 = arith.mulf %0, %1 : vector<16x32xf32>
    %cst = arith.constant dense<0.000000e+00> : vector<16xf32>
    %3 = vector.multi_reduction <add>, %2, %cst [1] : vector<16x32xf32> to vector<16xf32>
    %4 = vector.shape_cast %3 : vector<16xf32> to vector<1x16xf32>
    %c0_3 = arith.constant 0 : index
    %c0_4 = arith.constant 0 : index
    %5 = vector.load %arg3[%c0_3, %c0_4] : memref<1x16xf32, #tpu.memory_space<vmem>>, vector<1x16xf32>
    tpu.vector_store %arg3[%c0_3, %c0_4], %4 {strides = array<i32>} : memref<1x16xf32, #tpu.memory_space<vmem>>, vector<1x16xf32>,
    return
  }
  func.func @transform_0(%arg0: i32) -> (i32, i32) {
    %c0_i32 = arith.constant 0 : i32
    %c0_i32_0 = arith.constant 0 : i32
    return %arg0, %c0_i32 : i32, i32
  }
  func.func @transform_1(%arg0: i32) -> (i32, i32) {
    %c0_i32 = arith.constant 0 : i32
    %c0_i32_0 = arith.constant 0 : i32
    return %arg0, %c0_i32 : i32, i32
  }
  func.func @transform_2(%arg0: i32) -> (i32, i32) {
    %c0_i32 = arith.constant 0 : i32
    %c0_i32_0 = arith.constant 0 : i32
    return %c0_i32, %arg0 : i32, i32
  }
}

</mosaic_0001>

<llo_original>
// kernel: tpu_custom_call.1
$region0: #{tpu_custom_call.1}
  #allocation0 [shape = 'u32[]', space=smem, size = 0x4, offset = 0x4, fixed_abs, tag = 'smem constant byte address 0x4 - core index']
  #allocation1 [shape = 'u32[144,128]{1,0:T(1,128)}', space=vmem, size = 0x12000, scoped, tag = 'internal scratch']
  %s0 = inlined_call_operand.hbm [shape: f32[16,32], index: 0, kind: input, shape index: {}]
  %s1 = inlined_call_operand.hbm [shape: f32[16,32], index: 1, kind: input, shape index: {}]
  %s2 = inlined_call_operand.hbm [shape: f32[1,16], index: 2, kind: output, shape index: {}]
  %s3 = sld [smem:[#allocation0]]
  $region26: #{tpu_custom_call.1} parent=0
    _
  %s5 = ssub.s32 1, %s3
  %s6 = scalar_select 0, %s5, %s3
  $region1: #{tpu_custom_call.1} parent=0
    #allocation2 [shape = 'u8[8192]{0}', space=vmem, size = 0x2000, scoped, tag = 'input window, operand 0, single buffered']
    #allocation3 [shape = 's32[1]{0}', space=sflag, size = 0x4, scoped, tag = 'scoped memory for tpu_custom_call.1']
    #allocation4 [shape = 's32[1]{0}', space=sflag, size = 0x4, scoped, tag = 'scoped memory for tpu_custom_call.1']
    #allocation5 [shape = 'u8[8192]{0}', space=vmem, size = 0x2000, scoped, tag = 'input window, operand 1, single buffered']
    #allocation6 [shape = 's32[1]{0}', space=sflag, size = 0x4, scoped, tag = 'scoped memory for tpu_custom_call.1']
    #allocation7 [shape = 'u8[512]{0}', space=vmem, size = 0x400, scoped, tag = 'output window, operand 0, single buffered']
    %7 = vsyncpa [#allocation3], 0
    %8 = vsyncpa [#allocation6], 0
    %9 = vsyncpa [#allocation4], 0
    // Predicated region
    $region2: #{tpu_custom_call.1} parent=1 // pred_check
      _
    $region3: #{tpu_custom_call.1} parent=1 // pred_check_branch
      %11 = sbr.rel (0) target = $region5
    $region4: #{tpu_custom_call.1} parent=1 // pred_region
      %s13 = ssub.s32 256, 256
      %14 = vsyncadd [#allocation3], %s13
      %s15 = sshll.u32 [#allocation2], 4
      %s16 = int_to_ptr.vmem [resolvable:$true] %s15
      %21 = dma.hbm_to_vmem [thread:$0]  %s0, 256, %s16, [#allocation3], 128, 128, 8
    $region5: #{tpu_custom_call.1} parent=1 // pred_fallthru
      _
    // Predicated region
    $region6: #{tpu_custom_call.1} parent=1 // pred_check
      _
    $region7: #{tpu_custom_call.1} parent=1 // pred_check_branch
      %23 = sbr.rel (0) target = $region9
    $region8: #{tpu_custom_call.1} parent=1 // pred_region
      %s25 = ssub.s32 256, 256
      %26 = vsyncadd [#allocation6], %s25
      %s27 = sshll.u32 [#allocation5], 4
      %s28 = int_to_ptr.vmem [resolvable:$true] %s27
      %33 = dma.hbm_to_vmem [thread:$0]  %s1, 256, %s28, [#allocation6], 128, 128, 8
    $region9: #{tpu_custom_call.1} parent=1 // pred_fallthru
      _
    // Predicated region
    $region10: #{tpu_custom_call.1} parent=1 // pred_check
      _
    $region11: #{tpu_custom_call.1} parent=1 // pred_check_branch
      %35 = sbr.rel (0) target = $region13
    $region12: #{tpu_custom_call.1} parent=1 // pred_region
      %36 = dma.done [#allocation3], 256
    $region13: #{tpu_custom_call.1} parent=1 // pred_fallthru
      _
    // Predicated region
    $region14: #{tpu_custom_call.1} parent=1 // pred_check
      _
    $region15: #{tpu_custom_call.1} parent=1 // pred_check_branch
      %38 = sbr.rel (0) target = $region17
    $region16: #{tpu_custom_call.1} parent=1 // pred_region
      %39 = dma.done [#allocation6], 256
    $region17: #{tpu_custom_call.1} parent=1 // pred_fallthru
      _
    %v40 = vld [vmem:[#allocation2] sm:$0xff]
    %v41 = vld [vmem:[#allocation2 + $0x8] sm:$0xff]
    %v42 = vld [vmem:[#allocation5] sm:$0xff]
    %v43 = vld [vmem:[#allocation5 + $0x8] sm:$0xff]
    %v44 = vmul.f32 %v40, %v42
    %v45 = vmul.f32 %v41, %v43
    %vm46 = vcmask 261120
    %v47 = vsel %vm46, %v44, 0.0
    %48 = vadd.xlane.f32.xlu0 %v47
    %v49 = vpop.xlane.xlu0 %48
    %v50 = vsel %vm46, %v45, 0.0
    %51 = vadd.xlane.f32.xlu0 %v50
    %v52 = vpop.xlane.xlu0 %51
    %v55 = vlaneseq
    %v56 = vand.u32 %v55, 127
    %v57 = vlaneseq
    %v58 = vshrl.u32 %v57, 7
    %v59 = vsub.s32 %v56, %v58
    %v60 = vrot.slane %v49, %v59
    %v61 = vadd.s32 %v56, 4294967288
    %v62 = vlaneseq
    %v63 = vshrl.u32 %v62, 7
    %v64 = vsub.s32 %v61, %v63
    %v65 = vrot.slane %v52, %v64
    %vm66 = vcmask 130112
    %v67 = vsel %vm66, %v65, %v60
    %vm69 = vcmask 122880
    %70 = vst.msk [vmem:[#allocation7] sm:$0x1] %vm69, %v67
    // Predicated region
    $region18: #{tpu_custom_call.1} parent=1 // pred_check
      _
    $region19: #{tpu_custom_call.1} parent=1 // pred_check_branch
      %72 = sbr.rel (0) target = $region21
    $region20: #{tpu_custom_call.1} parent=1 // pred_region
      %s74 = ssub.s32 16, 16
      %75 = vsyncadd [#allocation4], %s74
      %s77 = sshll.u32 [#allocation7], 4
      %s78 = int_to_ptr.vmem [resolvable:$true] %s77
      %80 = dma.vmem_to_hbm [thread:$0]  %s78, 16, %s2, [#allocation4]
    $region21: #{tpu_custom_call.1} parent=1 // pred_fallthru
      _
    // Predicated region
    $region22: #{tpu_custom_call.1} parent=1 // pred_check
      _
    $region23: #{tpu_custom_call.1} parent=1 // pred_check_branch
      %82 = sbr.rel (0) target = $region25
    $region24: #{tpu_custom_call.1} parent=1 // pred_region
      %83 = dma.done [#allocation4], 16
    $region25: #{tpu_custom_call.1} parent=1 // pred_fallthru
      _
    %84 = vsyncpa [#allocation3], 1
    %85 = vsyncpa [#allocation6], 1
    %86 = vsyncpa [#allocation4], 1

</llo_original>
